<compile_context>
chip_gen: v7x
topology: tpu7x:2x2x1
jax: 0.10.0
libtpu: 0.0.40
codegen_flags: <defaults>
</compile_context>

<pallas_src>
import jax
import jax.numpy as jnp
from jax.experimental import pallas as pl
from jax.experimental.pallas import tpu as pltpu  # noqa: F401  (TPU backend import)

HIDDEN = 128
LANE = 128  # fc3 output features padded to this many lanes


def actor_kernel(x_ref, w1_ref, vecs_ref, w23_ref, out_ref):
    # ---- unpack the packed small operands (static slices: free views) ----
    b1 = vecs_ref[0:1, :]      # [1, 128]
    gamma = vecs_ref[1:2, :]
    beta = vecs_ref[2:3, :]
    b2 = vecs_ref[3:4, :]
    b3 = vecs_ref[4:5, :]      # zero-padded beyond action_size

    # ---- fc1 + ReLU (bf16 MXU operands, f32 accumulate) ----
    x = x_ref[...]                                               # [B, S] f32
    h1 = jnp.dot(x.astype(jnp.bfloat16), w1_ref[...],
                 preferred_element_type=jnp.float32)             # [B, 128] f32
    h1 = jnp.maximum(h1 + b1, 0.0)

    # ---- BatchNorm1d (training mode: batch stats, biased var, eps=1e-5),
    #      folded into a single per-feature scale/shift ----
    eps = 1e-5
    mean = jnp.mean(h1, axis=0, keepdims=True)                   # [1, 128]
    ex2 = jnp.mean(h1 * h1, axis=0, keepdims=True)               # [1, 128]
    var = jnp.maximum(ex2 - mean * mean, 0.0)                    # one-pass, clamped
    scale = jax.lax.rsqrt(var + eps) * gamma
    shift = beta - mean * scale
    h1n = h1 * scale + shift

    # ---- fc2 + ReLU / fc3 + tanh (w2||w3 packed; slice at the 128-lane boundary) ----
    w23 = w23_ref[...]                                           # [128, 256] bf16
    h2 = jnp.dot(h1n.astype(jnp.bfloat16), w23[:, :HIDDEN],
                 preferred_element_type=jnp.float32)
    h2 = jnp.maximum(h2 + b2, 0.0)

    o = jnp.dot(h2.astype(jnp.bfloat16), w23[:, HIDDEN:],
                preferred_element_type=jnp.float32)              # [B, 128] (padded)
    out_ref[...] = jnp.tanh(o + b3).astype(out_ref.dtype)


def prepare_params(params):
    """One-time preprocessing: pack small vectors, pad fc3 to 128 lanes, bf16 weights."""
    A = params["w3"].shape[1]
    # Pack the five (1,128) f32 vectors into one (8,128) slab:
    #   row 0: b1, row 1: gamma, row 2: beta, row 3: b2, row 4: b3 (padded), rows 5-7: 0
    vecs = jnp.zeros((8, HIDDEN), jnp.float32)
    vecs = vecs.at[0, :].set(params["b1"][0])
    vecs = vecs.at[1, :].set(params["gamma"][0])
    vecs = vecs.at[2, :].set(params["beta"][0])
    vecs = vecs.at[3, :].set(params["b2"][0])
    vecs = vecs.at[4, :A].set(params["b3"][0])
    # Concatenate w2 || w3_padded -> single (128, 256) bf16 weight slab.
    w3p = jnp.zeros((HIDDEN, LANE), jnp.float32).at[:, :A].set(params["w3"])
    w23 = jnp.concatenate([params["w2"], w3p], axis=1).astype(jnp.bfloat16)
    return dict(
        w1=params["w1"].astype(jnp.bfloat16),
        vecs=vecs,
        w23=w23,
        action_size=A,
    )


def make_actor_forward(prepped):
    """Build a jitted forward closing over prepared params (no per-step re-prep)."""
    A = prepped["action_size"]
    w1, vecs, w23 = prepped["w1"], prepped["vecs"], prepped["w23"]

    @jax.jit
    def fwd(x):
        B = x.shape[0]
        args = (x, w1, vecs, w23)
        full = lambda arr: pl.BlockSpec(arr.shape, lambda: (0,) * arr.ndim)
        out_padded = pl.pallas_call(
            actor_kernel,
            out_shape=jax.ShapeDtypeStruct((B, LANE), jnp.float32),
            in_specs=[full(a) for a in args],
            out_specs=pl.BlockSpec((B, LANE), lambda: (0, 0)),
        )(*args)
        return out_padded[:, :A]

    return fwd


def init_params(key, state_size, action_size, hidden=HIDDEN):
    """Deterministic parameter init mimicking the PyTorch module's init scheme."""
    ks = jax.random.split(key, 6)
    # NOTE: original hidden_init uses weight.size()[0] (= out_features) as "fan_in".
    lim1 = 1.0 / jnp.sqrt(jnp.float32(hidden))
    lim2 = 1.0 / jnp.sqrt(jnp.float32(hidden))
    w1 = jax.random.uniform(ks[0], (state_size, hidden), jnp.float32, -lim1, lim1)
    b1 = jax.random.uniform(ks[1], (1, hidden), jnp.float32,
                            -1.0 / jnp.sqrt(state_size), 1.0 / jnp.sqrt(state_size))
    w2 = jax.random.uniform(ks[2], (hidden, hidden), jnp.float32, -lim2, lim2)
    b2 = jax.random.uniform(ks[3], (1, hidden), jnp.float32,
                            -1.0 / jnp.sqrt(hidden), 1.0 / jnp.sqrt(hidden))
    w3 = jax.random.uniform(ks[4], (hidden, action_size), jnp.float32, -3e-3, 3e-3)
    b3 = jax.random.uniform(ks[5], (1, action_size), jnp.float32,
                            -1.0 / jnp.sqrt(hidden), 1.0 / jnp.sqrt(hidden))
    gamma = jnp.ones((1, hidden), jnp.float32)   # BatchNorm1d affine defaults
    beta = jnp.zeros((1, hidden), jnp.float32)
    return dict(w1=w1, b1=b1, w2=w2, b2=b2, w3=w3, b3=b3, gamma=gamma, beta=beta)


def reference_forward(x, params):
    """Pure-JAX f32 reference of the PyTorch train-mode forward."""
    h1 = jnp.maximum(x @ params["w1"] + params["b1"], 0.0)
    mean = jnp.mean(h1, axis=0, keepdims=True)
    var = jnp.mean((h1 - mean) ** 2, axis=0, keepdims=True)
    h1n = (h1 - mean) * jax.lax.rsqrt(var + 1e-5) * params["gamma"] + params["beta"]
    h2 = jnp.maximum(h1n @ params["w2"] + params["b2"], 0.0)
    return jnp.tanh(h2 @ params["w3"] + params["b3"])


if __name__ == "__main__":
    key = jax.random.PRNGKey(0)
    k_x, k_p = jax.random.split(key)

    batch, state_size, action_size = 8, 32, 8
    x = jax.random.normal(k_x, (batch, state_size), jnp.float32)
    params = init_params(k_p, state_size, action_size)
    prepped = prepare_params(params)          # one-time prep (bf16 cast / pack / pad)
    actor_forward = make_actor_forward(prepped)

    out = actor_forward(x)
    out = jax.block_until_ready(out)

    # sanity: correct shape, tanh-bounded, finite, close to f32 reference
    assert out.shape == (batch, action_size)
    assert bool(jnp.all(jnp.abs(out) <= 1.0))
    assert bool(jnp.all(jnp.isfinite(out)))
    ref = reference_forward(x, params)
    assert bool(jnp.max(jnp.abs(out - ref)) < 8e-2)  # bf16 matmul tolerance
    print("KERNEL_OK")
</pallas_src>

<mosaic_0001>
module attributes {stable_mosaic.version = 11 : i64} {
  func.func @actor_kernel(%arg0: memref<8x32xf32, #tpu.memory_space<vmem>>, %arg1: memref<32x128xbf16, #tpu.memory_space<vmem>>, %arg2: memref<8x128xf32, #tpu.memory_space<vmem>>, %arg3: memref<128x256xbf16, #tpu.memory_space<vmem>>, %arg4: memref<8x128xf32, #tpu.memory_space<vmem>>) attributes {dimension_semantics = [], scalar_prefetch = 0 : i64, scratch_operands = 0 : i64, tpu.core_type = #tpu.core_type<tc>} {
    %c0 = arith.constant 0 : index
    %c0_0 = arith.constant 0 : index
    %0 = vector.load %arg2[%c0, %c0_0] : memref<8x128xf32, #tpu.memory_space<vmem>>, vector<1x128xf32>
    %c1 = arith.constant 1 : index
    %c0_1 = arith.constant 0 : index
    %1 = vector.load %arg2[%c1, %c0_1] : memref<8x128xf32, #tpu.memory_space<vmem>>, vector<1x128xf32>
    %c2 = arith.constant 2 : index
    %c0_2 = arith.constant 0 : index
    %2 = vector.load %arg2[%c2, %c0_2] : memref<8x128xf32, #tpu.memory_space<vmem>>, vector<1x128xf32>
    %c3 = arith.constant 3 : index
    %c0_3 = arith.constant 0 : index
    %3 = vector.load %arg2[%c3, %c0_3] : memref<8x128xf32, #tpu.memory_space<vmem>>, vector<1x128xf32>
    %c4 = arith.constant 4 : index
    %c0_4 = arith.constant 0 : index
    %4 = vector.load %arg2[%c4, %c0_4] : memref<8x128xf32, #tpu.memory_space<vmem>>, vector<1x128xf32>
    %c0_5 = arith.constant 0 : index
    %c0_6 = arith.constant 0 : index
    %5 = vector.load %arg0[%c0_5, %c0_6] : memref<8x32xf32, #tpu.memory_space<vmem>>, vector<8x32xf32>
    %6 = arith.truncf %5 : vector<8x32xf32> to vector<8x32xbf16>
    %c0_7 = arith.constant 0 : index
    %c0_8 = arith.constant 0 : index
    %7 = vector.load %arg1[%c0_7, %c0_8] : memref<32x128xbf16, #tpu.memory_space<vmem>>, vector<32x128xbf16>
    %cst = arith.constant dense<0.000000e+00> : vector<8x128xf32>
    %8 = tpu.matmul %6, %7, %cst {dimension_numbers = #tpu.dot_dimension_numbers<[1], [0], [0], [1], [0, 0, 1, 1], [], []>} : vector<8x32xbf16>, vector<32x128xbf16>, vector<8x128xf32> -> vector<8x128xf32>
    %9 = vector.broadcast %0 : vector<1x128xf32> to vector<8x128xf32>
    %10 = arith.addf %8, %9 : vector<8x128xf32>
    %cst_9 = arith.constant 0.000000e+00 : f32
    %11 = vector.broadcast %cst_9 : f32 to vector<8x128xf32>
    %12 = arith.maximumf %10, %11 : vector<8x128xf32>
    %cst_10 = arith.constant dense<0.000000e+00> : vector<128xf32>
    %13 = vector.multi_reduction <add>, %12, %cst_10 [0] : vector<8x128xf32> to vector<128xf32>
    %14 = vector.shape_cast %13 : vector<128xf32> to vector<1x128xf32>
    %cst_11 = arith.constant 8.000000e+00 : f32
    %15 = vector.broadcast %cst_11 : f32 to vector<1x128xf32>
    %16 = arith.divf %14, %15 : vector<1x128xf32>
    %17 = arith.mulf %12, %12 : vector<8x128xf32>
    %cst_12 = arith.constant dense<0.000000e+00> : vector<128xf32>
    %18 = vector.multi_reduction <add>, %17, %cst_12 [0] : vector<8x128xf32> to vector<128xf32>
    %19 = vector.shape_cast %18 : vector<128xf32> to vector<1x128xf32>
    %cst_13 = arith.constant 8.000000e+00 : f32
    %20 = vector.broadcast %cst_13 : f32 to vector<1x128xf32>
    %21 = arith.divf %19, %20 : vector<1x128xf32>
    %22 = arith.mulf %16, %16 : vector<1x128xf32>
    %23 = arith.subf %21, %22 : vector<1x128xf32>
    %cst_14 = arith.constant 0.000000e+00 : f32
    %24 = vector.broadcast %cst_14 : f32 to vector<1x128xf32>
    %25 = arith.maximumf %23, %24 : vector<1x128xf32>
    %cst_15 = arith.constant 9.99999974E-6 : f32
    %26 = vector.broadcast %cst_15 : f32 to vector<1x128xf32>
    %27 = arith.addf %25, %26 : vector<1x128xf32>
    %28 = math.rsqrt %27 : vector<1x128xf32>
    %29 = arith.mulf %28, %1 : vector<1x128xf32>
    %30 = arith.mulf %16, %29 : vector<1x128xf32>
    %31 = arith.subf %2, %30 : vector<1x128xf32>
    %32 = vector.broadcast %29 : vector<1x128xf32> to vector<8x128xf32>
    %33 = arith.mulf %12, %32 : vector<8x128xf32>
    %34 = vector.broadcast %31 : vector<1x128xf32> to vector<8x128xf32>
    %35 = arith.addf %33, %34 : vector<8x128xf32>
    %c0_16 = arith.constant 0 : index
    %c0_17 = arith.constant 0 : index
    %36 = vector.load %arg3[%c0_16, %c0_17] : memref<128x256xbf16, #tpu.memory_space<vmem>>, vector<128x256xbf16>
    %37 = arith.truncf %35 : vector<8x128xf32> to vector<8x128xbf16>
    %38 = vector.extract_strided_slice %36 {offsets = [0, 0], sizes = [128, 128], strides = [1, 1]} : vector<128x256xbf16> to vector<128x128xbf16>
    %cst_18 = arith.constant dense<0.000000e+00> : vector<8x128xf32>
    %39 = tpu.matmul %37, %38, %cst_18 {dimension_numbers = #tpu.dot_dimension_numbers<[1], [0], [0], [1], [0, 0, 1, 1], [], []>} : vector<8x128xbf16>, vector<128x128xbf16>, vector<8x128xf32> -> vector<8x128xf32>
    %40 = vector.broadcast %3 : vector<1x128xf32> to vector<8x128xf32>
    %41 = arith.addf %39, %40 : vector<8x128xf32>
    %cst_19 = arith.constant 0.000000e+00 : f32
    %42 = vector.broadcast %cst_19 : f32 to vector<8x128xf32>
    %43 = arith.maximumf %41, %42 : vector<8x128xf32>
    %44 = arith.truncf %43 : vector<8x128xf32> to vector<8x128xbf16>
    %45 = vector.extract_strided_slice %36 {offsets = [0, 128], sizes = [128, 128], strides = [1, 1]} : vector<128x256xbf16> to vector<128x128xbf16>
    %cst_20 = arith.constant dense<0.000000e+00> : vector<8x128xf32>
    %46 = tpu.matmul %44, %45, %cst_20 {dimension_numbers = #tpu.dot_dimension_numbers<[1], [0], [0], [1], [0, 0, 1, 1], [], []>} : vector<8x128xbf16>, vector<128x128xbf16>, vector<8x128xf32> -> vector<8x128xf32>
    %47 = vector.broadcast %4 : vector<1x128xf32> to vector<8x128xf32>
    %48 = arith.addf %46, %47 : vector<8x128xf32>
    %49 = math.tanh %48 : vector<8x128xf32>
    %c0_21 = arith.constant 0 : index
    %c0_22 = arith.constant 0 : index
    %50 = vector.load %arg4[%c0_21, %c0_22] : memref<8x128xf32, #tpu.memory_space<vmem>>, vector<8x128xf32>
    tpu.vector_store %arg4[%c0_21, %c0_22], %49 {strides = array<i32>} : memref<8x128xf32, #tpu.memory_space<vmem>>, vector<8x128xf32>,
    return
  }
}

</mosaic_0001>

<llo_original>
// kernel: fwd.1
$region0: #{fwd.1}
  #allocation0 [shape = 'u32[]', space=smem, size = 0x4, offset = 0x4, fixed_abs, tag = 'smem constant byte address 0x4 - core index']
  #allocation1 [shape = 'u32[144,128]{1,0:T(1,128)}', space=vmem, size = 0x12000, scoped, tag = 'internal scratch']
  %s0 = inlined_call_operand.vmem [shape: f32[8,32], index: 0, kind: input, shape index: {}]
  %s1 = inlined_call_operand.vmem [shape: bf16[32,128], index: 1, kind: input, shape index: {}]
  %s2 = inlined_call_operand.vmem [shape: f32[8,128], index: 2, kind: input, shape index: {}]
  %s3 = inlined_call_operand.vmem [shape: bf16[128,256], index: 3, kind: input, shape index: {}]
  %s4 = inlined_call_operand.hbm [shape: f32[8,128], index: 4, kind: output, shape index: {}]
  %s5 = sld [smem:[#allocation0]]
  $region26: #{fwd.1} parent=0
    _
  %s7 = ssub.s32 1, %s5
  %s8 = scalar_select 0, %s7, %s5
  $region1: #{fwd.1} parent=0
    #allocation2 [shape = 'u8[4096]{0}', space=vmem, size = 0x1000, scoped, tag = 'output window, operand 0, single buffered']
    #allocation3 [shape = 's32[1]{0}', space=sflag, size = 0x4, scoped, tag = 'scoped memory for fwd.1']
    %9 = vsyncpa [#allocation3], 0
    // Predicated region
    $region2: #{fwd.1} parent=1 // pred_check
      _
    $region3: #{fwd.1} parent=1 // pred_check_branch
      %11 = sbr.rel (0) target = $region5
    $region4: #{fwd.1} parent=1 // pred_region
      _
    $region5: #{fwd.1} parent=1 // pred_fallthru
      _
    // Predicated region
    $region6: #{fwd.1} parent=1 // pred_check
      _
    $region7: #{fwd.1} parent=1 // pred_check_branch
      %13 = sbr.rel (0) target = $region9
    $region8: #{fwd.1} parent=1 // pred_region
      _
    $region9: #{fwd.1} parent=1 // pred_fallthru
      _
    // Predicated region
    $region10: #{fwd.1} parent=1 // pred_check
      _
    $region11: #{fwd.1} parent=1 // pred_check_branch
      %15 = sbr.rel (0) target = $region13
    $region12: #{fwd.1} parent=1 // pred_region
      _
    $region13: #{fwd.1} parent=1 // pred_fallthru
      _
    // Predicated region
    $region14: #{fwd.1} parent=1 // pred_check
      _
    $region15: #{fwd.1} parent=1 // pred_check_branch
      %17 = sbr.rel (0) target = $region17
    $region16: #{fwd.1} parent=1 // pred_region
      _
    $region17: #{fwd.1} parent=1 // pred_fallthru
      _
    %v19 = vld [vmem:[%s2] sm:$0x1]
    %v20 = vld [vmem:[%s2 + $0x1] sm:$0x1]
    %v21 = vld [vmem:[%s2 + $0x2] sm:$0x1]
    %v22 = vld [vmem:[%s2 + $0x3] sm:$0x1]
    %v23 = vld [vmem:[%s2 + $0x4] sm:$0x1]
    %v24 = vld [vmem:[%s0] sm:$0xff]
    %v25 = vpack.c.bf16 %v24, %v24
    %v26 = vld [vmem:[%s1] sm:$0xf]
    %v27 = vld [vmem:[%s1 + $0x4] sm:$0xf]
    %v28 = vld [vmem:[%s1 + $0x8] sm:$0xf]
    %v29 = vld [vmem:[%s1 + $0xc] sm:$0xf]
    %v30 = vlaneseq
    %v31 = vshrl.u32 %v30, 7
    %v32 = vsub.s32 0, %v31
    %v33 = vrot.slane %v19, %v32
    %v38 = vunpack.c.l.b16 %v26
    %v39 = vunpack.c.l.b16 %v27
    %v40 = vunpack.c.l.b16 %v28
    %v41 = vunpack.c.l.b16 %v29
    %v42 = vpack.c.b16 %v39, %v38
    %v43 = vpack.c.b16 %v41, %v40
    %vm46 = vcmask 261120
    %v48 = vsel %vm46, %v25, 0
    %50 = vmatprep.subr.bf16.mxu0 0
    %51 = vmatpush1.bf16.msra.mxu0 %v42
    %52 = vmatprep.subr.bf16.mxu0 0
    %53 = vmatpush1.bf16.msra.mxu0 %v43
    %54 = vmatprep.subr.bf16.mxu0 0
    %55 = vmatpush1.bf16.msra.mxu0 0
    %56 = vmatprep.subr.bf16.mxu0 0
    %57 = vmatpush1.bf16.msra.mxu0 0
    %58 = vmatprep.subr.bf16.mxu0 0
    %59 = vmatpush1.bf16.msra.mxu0 0
    %60 = vmatprep.subr.bf16.mxu0 0
    %61 = vmatpush1.bf16.msra.mxu0 0
    %62 = vmatprep.subr.bf16.mxu0 0
    %63 = vmatpush1.bf16.msra.mxu0 0
    %64 = vmatprep.subr.bf16.mxu0 0
    %65 = vmatpush1.bf16.msra.mxu0 0
    %66 = vmatprep.subr.bf16.mxu0 0
    %67 = vmatpush1.bf16.msra.mxu0 0
    %68 = vmatprep.subr.bf16.mxu0 0
    %69 = vmatpush1.bf16.msra.mxu0 0
    %70 = vmatprep.subr.bf16.mxu0 0
    %71 = vmatpush1.bf16.msra.mxu0 0
    %72 = vmatprep.subr.bf16.mxu0 0
    %73 = vmatpush1.bf16.msra.mxu0 0
    %74 = vmatprep.subr.bf16.mxu0 0
    %75 = vmatpush1.bf16.msra.mxu0 0
    %76 = vmatprep.subr.bf16.mxu0 0
    %77 = vmatpush1.bf16.msra.mxu0 0
    %78 = vmatprep.subr.bf16.mxu0 0
    %79 = vmatpush1.bf16.msra.mxu0 0
    %80 = vmatprep.subr.bf16.mxu0 0
    %81 = vmatpush1.bf16.msra.mxu0 0
    %82 = vmatprep.mubr.bf16.mxu0 0
    %83 = vmatmul.mubr.bf16.gmra.mrb[0].mxu0 %v48
    %v84 = vpop.f32.mrb[0].mxu0
    %v85 = vadd.f32 %v33, %v84
    %v86 = vpop.f32.mrb[0].mxu0
    %v87 = vpop.f32.mrb[0].mxu0
    %v88 = vpop.f32.mrb[0].mxu0
    %89 = vdwg.mxu0
    %v90 = vmax.f32 %v85, 0.0
    %v91 = vrot.slane %v90, 4
    %v92 = vadd.f32 %v90, %v91
    %v93 = vrot.slane %v92, 2
    %v94 = vadd.f32 %v92, %v93
    %v95 = vrot.slane %v94, 1
    %v96 = vadd.f32 %v94, %v95
    %v97 = vrcp.pop 8.0
    %v98 = vmul.f32 %v96, %v97
    %v99 = vmul.f32 %v90, %v90
    %v100 = vrot.slane %v99, 4
    %v101 = vadd.f32 %v99, %v100
    %v102 = vrot.slane %v101, 2
    %v103 = vadd.f32 %v101, %v102
    %v104 = vrot.slane %v103, 1
    %v105 = vadd.f32 %v103, %v104
    %v106 = vmul.f32 %v105, %v97
    %v107 = vmul.f32 %v98, %v98
    %v108 = vsub.f32 %v106, %v107
    %v109 = vmax.f32 %v108, 0.0
    %v110 = vadd.f32 %v109, 1e-05
    %v111 = vrsqrt.pop %v110
    %v112 = vmul.f32 %v111, %v20
    %v113 = vmul.f32 %v98, %v112
    %v114 = vsub.f32 %v21, %v113
    %v115 = vlaneseq
    %v116 = vshrl.u32 %v115, 7
    %v117 = vsub.s32 0, %v116
    %v118 = vrot.slane %v112, %v117
    %v119 = vmul.f32 %v90, %v118
    %v120 = vlaneseq
    %v121 = vshrl.u32 %v120, 7
    %v122 = vsub.s32 0, %v121
    %v123 = vrot.slane %v114, %v122
    %v124 = vadd.f32 %v119, %v123
    %v125 = vld [vmem:[%s3] sm:$0xff]
    %v126 = vld [vmem:[%s3 + $0x8] sm:$0xff]
    %v127 = vld [vmem:[%s3 + $0x10] sm:$0xff]
    %v128 = vld [vmem:[%s3 + $0x18] sm:$0xff]
    %v129 = vld [vmem:[%s3 + $0x20] sm:$0xff]
    %v130 = vld [vmem:[%s3 + $0x28] sm:$0xff]
    %v131 = vld [vmem:[%s3 + $0x30] sm:$0xff]
    %v132 = vld [vmem:[%s3 + $0x38] sm:$0xff]
    %v133 = vld [vmem:[%s3 + $0x40] sm:$0xff]
    %v134 = vld [vmem:[%s3 + $0x48] sm:$0xff]
    %v135 = vld [vmem:[%s3 + $0x50] sm:$0xff]
    %v136 = vld [vmem:[%s3 + $0x58] sm:$0xff]
    %v137 = vld [vmem:[%s3 + $0x60] sm:$0xff]
    %v138 = vld [vmem:[%s3 + $0x68] sm:$0xff]
    %v139 = vld [vmem:[%s3 + $0x70] sm:$0xff]
    %v140 = vld [vmem:[%s3 + $0x78] sm:$0xff]
    %v141 = vpack.c.bf16 %v124, %v124
    %v142 = vlaneseq
    %v143 = vshrl.u32 %v142, 7
    %v144 = vsub.s32 0, %v143
    %v145 = vrot.slane %v22, %v144
    %v162 = vunpack.c.l.b16 %v125
    %v163 = vunpack.c.l.b16 %v126
    %v164 = vunpack.c.l.b16 %v127
    %v165 = vunpack.c.l.b16 %v128
    %v166 = vunpack.c.l.b16 %v129
    %v167 = vunpack.c.l.b16 %v130
    %v168 = vunpack.c.l.b16 %v131
    %v169 = vunpack.c.l.b16 %v132
    %v170 = vunpack.c.l.b16 %v133
    %v171 = vunpack.c.l.b16 %v134
    %v172 = vunpack.c.l.b16 %v135
    %v173 = vunpack.c.l.b16 %v136
    %v174 = vunpack.c.l.b16 %v137
    %v175 = vunpack.c.l.b16 %v138
    %v176 = vunpack.c.l.b16 %v139
    %v177 = vunpack.c.l.b16 %v140
    %v178 = vpack.c.b16 %v163, %v162
    %v179 = vpack.c.b16 %v165, %v164
    %v180 = vpack.c.b16 %v167, %v166
    %v181 = vpack.c.b16 %v169, %v168
    %v182 = vpack.c.b16 %v171, %v170
    %v183 = vpack.c.b16 %v173, %v172
    %v184 = vpack.c.b16 %v175, %v174
    %v185 = vpack.c.b16 %v177, %v176
    %194 = vmatprep.subr.bf16.mxu0 0
    %195 = vmatpush1.bf16.msra.mxu0 %v178
    %196 = vmatprep.subr.bf16.mxu0 0
    %197 = vmatpush1.bf16.msra.mxu0 %v179
    %198 = vmatprep.subr.bf16.mxu0 0
    %199 = vmatpush1.bf16.msra.mxu0 %v180
    %200 = vmatprep.subr.bf16.mxu0 0
    %201 = vmatpush1.bf16.msra.mxu0 %v181
    %202 = vmatprep.subr.bf16.mxu0 0
    %203 = vmatpush1.bf16.msra.mxu0 %v182
    %204 = vmatprep.subr.bf16.mxu0 0
    %205 = vmatpush1.bf16.msra.mxu0 %v183
    %206 = vmatprep.subr.bf16.mxu0 0
    %207 = vmatpush1.bf16.msra.mxu0 %v184
    %208 = vmatprep.subr.bf16.mxu0 0
    %209 = vmatpush1.bf16.msra.mxu0 %v185
    %210 = vmatprep.subr.bf16.mxu0 0
    %211 = vmatpush1.bf16.msra.mxu0 0
    %212 = vmatprep.subr.bf16.mxu0 0
    %213 = vmatpush1.bf16.msra.mxu0 0
    %214 = vmatprep.subr.bf16.mxu0 0
    %215 = vmatpush1.bf16.msra.mxu0 0
    %216 = vmatprep.subr.bf16.mxu0 0
    %217 = vmatpush1.bf16.msra.mxu0 0
    %218 = vmatprep.subr.bf16.mxu0 0
    %219 = vmatpush1.bf16.msra.mxu0 0
    %220 = vmatprep.subr.bf16.mxu0 0
    %221 = vmatpush1.bf16.msra.mxu0 0
    %222 = vmatprep.subr.bf16.mxu0 0
    %223 = vmatpush1.bf16.msra.mxu0 0
    %224 = vmatprep.subr.bf16.mxu0 0
    %225 = vmatpush1.bf16.msra.mxu0 0
    %226 = vmatprep.mubr.bf16.mxu0 0
    %227 = vmatmul.mubr.bf16.gmra.mrb[0].mxu0 %v141
    %v228 = vpop.f32.mrb[0].mxu0
    %v229 = vadd.f32 %v145, %v228
    %v230 = vpop.f32.mrb[0].mxu0
    %v231 = vpop.f32.mrb[0].mxu0
    %v232 = vpop.f32.mrb[0].mxu0
    %233 = vdwg.mxu0
    %v234 = vmax.f32 %v229, 0.0
    %v235 = vpack.c.bf16 %v234, %v234
    %v236 = vlaneseq
    %v237 = vshrl.u32 %v236, 7
    %v238 = vsub.s32 0, %v237
    %v239 = vrot.slane %v23, %v238
    %v240 = vunpack.c.h.b16 %v125
    %v241 = vunpack.c.h.b16 %v126
    %v242 = vunpack.c.h.b16 %v127
    %v243 = vunpack.c.h.b16 %v128
    %v244 = vunpack.c.h.b16 %v129
    %v245 = vunpack.c.h.b16 %v130
    %v246 = vunpack.c.h.b16 %v131
    %v247 = vunpack.c.h.b16 %v132
    %v248 = vunpack.c.h.b16 %v133
    %v249 = vunpack.c.h.b16 %v134
    %v250 = vunpack.c.h.b16 %v135
    %v251 = vunpack.c.h.b16 %v136
    %v252 = vunpack.c.h.b16 %v137
    %v253 = vunpack.c.h.b16 %v138
    %v254 = vunpack.c.h.b16 %v139
    %v255 = vunpack.c.h.b16 %v140
    %v256 = vpack.c.b16 %v241, %v240
    %v257 = vpack.c.b16 %v243, %v242
    %v258 = vpack.c.b16 %v245, %v244
    %v259 = vpack.c.b16 %v247, %v246
    %v260 = vpack.c.b16 %v249, %v248
    %v261 = vpack.c.b16 %v251, %v250
    %v262 = vpack.c.b16 %v253, %v252
    %v263 = vpack.c.b16 %v255, %v254
    %272 = vmatprep.subr.bf16.mxu0 0
    %273 = vmatpush1.bf16.msra.mxu0 %v256
    %274 = vmatprep.subr.bf16.mxu0 0
    %275 = vmatpush1.bf16.msra.mxu0 %v257
    %276 = vmatprep.subr.bf16.mxu0 0
    %277 = vmatpush1.bf16.msra.mxu0 %v258
    %278 = vmatprep.subr.bf16.mxu0 0
    %279 = vmatpush1.bf16.msra.mxu0 %v259
    %280 = vmatprep.subr.bf16.mxu0 0
    %281 = vmatpush1.bf16.msra.mxu0 %v260
    %282 = vmatprep.subr.bf16.mxu0 0
    %283 = vmatpush1.bf16.msra.mxu0 %v261
    %284 = vmatprep.subr.bf16.mxu0 0
    %285 = vmatpush1.bf16.msra.mxu0 %v262
    %286 = vmatprep.subr.bf16.mxu0 0
    %287 = vmatpush1.bf16.msra.mxu0 %v263
    %288 = vmatprep.subr.bf16.mxu0 0
    %289 = vmatpush1.bf16.msra.mxu0 0
    %290 = vmatprep.subr.bf16.mxu0 0
    %291 = vmatpush1.bf16.msra.mxu0 0
    %292 = vmatprep.subr.bf16.mxu0 0
    %293 = vmatpush1.bf16.msra.mxu0 0
    %294 = vmatprep.subr.bf16.mxu0 0
    %295 = vmatpush1.bf16.msra.mxu0 0
    %296 = vmatprep.subr.bf16.mxu0 0
    %297 = vmatpush1.bf16.msra.mxu0 0
    %298 = vmatprep.subr.bf16.mxu0 0
    %299 = vmatpush1.bf16.msra.mxu0 0
    %300 = vmatprep.subr.bf16.mxu0 0
    %301 = vmatpush1.bf16.msra.mxu0 0
    %302 = vmatprep.subr.bf16.mxu0 0
    %303 = vmatpush1.bf16.msra.mxu0 0
    %304 = vmatprep.mubr.bf16.mxu0 0
    %305 = vmatmul.mubr.bf16.gmra.mrb[0].mxu0 %v235
    %v306 = vpop.f32.mrb[0].mxu0
    %v307 = vadd.f32 %v239, %v306
    %v308 = vpop.f32.mrb[0].mxu0
    %v309 = vpop.f32.mrb[0].mxu0
    %v310 = vpop.f32.mrb[0].mxu0
    %311 = vdwg.mxu0
    %v312 = vtanh.pop %v307
    %313 = vst [vmem:[#allocation2] sm:$0xff] %v312
    // Predicated region
    $region18: #{fwd.1} parent=1 // pred_check
      _
    $region19: #{fwd.1} parent=1 // pred_check_branch
      %315 = sbr.rel (0) target = $region21
    $region20: #{fwd.1} parent=1 // pred_region
      %s317 = ssub.s32 128, 128
      %318 = vsyncadd [#allocation3], %s317
      %s320 = sshll.u32 [#allocation2], 4
      %s321 = int_to_ptr.vmem [resolvable:$true] %s320
      %323 = dma.vmem_to_hbm [thread:$0]  %s321, 128, %s4, [#allocation3]
    $region21: #{fwd.1} parent=1 // pred_fallthru
      _
    // Predicated region
    $region22: #{fwd.1} parent=1 // pred_check
      _
    $region23: #{fwd.1} parent=1 // pred_check_branch
      %325 = sbr.rel (0) target = $region25
    $region24: #{fwd.1} parent=1 // pred_region
      %326 = dma.done [#allocation3], 128
    $region25: #{fwd.1} parent=1 // pred_fallthru
      _
    %327 = vsyncpa [#allocation3], 1

</llo_original>
